<compile_context>
chip_gen: v7x
topology: tpu7x:2x2x1
jax: 0.10.0
libtpu: 0.0.40
codegen_flags: <defaults>
</compile_context>

<pallas_src>
import functools

import jax
import jax.numpy as jnp
import numpy as np
from jax import lax
from jax.experimental import pallas as pl
from jax.experimental.pallas import tpu as pltpu

_LANE = 128
_SUB = 8


def _kl_partial_kernel(mu_ref, std_ref, out_ref, *, block_rows, n_rows,
                       ragged):
    """Per-chunk partial sums of mu^2 + std^2 - 2*log(std) - 1.

    Emits an (8, 128) lane-dense partial-sum tile per grid step; all scaling
    and the final scalar reduce happen in the wrapper.
    """
    mu = mu_ref[...].astype(jnp.float32)
    std = std_ref[...].astype(jnp.float32)

    if ragged:
        # Last grid block overruns the array; OOB contents are unspecified,
        # so force mu=0 / std=1 there (contributes exactly 0 to the sum).
        i = pl.program_id(0)
        row = lax.broadcasted_iota(jnp.int32, (block_rows, _LANE), 0)
        valid = (i * block_rows + row) < n_rows
        mu = jnp.where(valid, mu, 0.0)
        std = jnp.where(valid, std, 1.0)

    term = mu * mu + std * std - 2.0 * jnp.log(std) - 1.0

    # Fold sublane groups into one (8,128) vreg: pure cross-vreg VPU adds,
    # no per-step XLU reduce and no serialized scalar read-modify-write.
    out_ref[0] = term.reshape(block_rows // _SUB, _SUB, _LANE).sum(axis=0)


def kl_loss_forward(mu, std, loss_weight=0.1, reduction='mean'):
    """Pallas implementation of mmseg KLLoss.forward (scalar output)."""
    assert reduction in (None, 'none', 'mean', 'sum')
    B = mu.shape[0]
    n = int(np.prod(mu.shape[1:]))
    total = B * n

    # Flatten in native dtype; pad only the tiny tail (<= 1023 elems) so the
    # slab is (R, 128) with R a multiple of 8. mu=0 / std=1 padding adds 0.
    pad = (-total) % (_LANE * _SUB)
    mu_flat = jnp.reshape(mu, (-1,))
    std_flat = jnp.reshape(std, (-1,))
    if pad:
        mu_flat = jnp.pad(mu_flat, (0, pad), constant_values=0)
        std_flat = jnp.pad(std_flat, (0, pad), constant_values=1)
    R = (total + pad) // _LANE
    mu2 = mu_flat.reshape(R, _LANE)
    std2 = std_flat.reshape(R, _LANE)

    # Fixed row chunks (~256 KiB f32 per input block) independent of B / CHW.
    block_rows = min(512, R)           # R and 512 are multiples of 8
    num_chunks = pl.cdiv(R, block_rows)
    ragged = (R % block_rows) != 0

    kernel = functools.partial(
        _kl_partial_kernel,
        block_rows=block_rows,
        n_rows=R,
        ragged=ragged,
    )

    partials = pl.pallas_call(
        kernel,
        out_shape=jax.ShapeDtypeStruct((num_chunks, _SUB, _LANE), jnp.float32),
        grid=(num_chunks,),
        in_specs=[
            pl.BlockSpec((block_rows, _LANE), lambda i: (i, 0)),
            pl.BlockSpec((block_rows, _LANE), lambda i: (i, 0)),
        ],
        out_specs=pl.BlockSpec((1, _SUB, _LANE), lambda i: (i, 0, 0)),
        compiler_params=pltpu.CompilerParams(
            dimension_semantics=("parallel",)),  # independent chunks
    )(mu2, std2)

    # forward(): sum_i 0.5 * red(term_i) * lw, then * lw / B. Same n per
    # sample, so 'mean' just divides the global sum by n.
    scale = 0.5 * float(loss_weight) * float(loss_weight) / B
    if reduction == 'mean':
        scale = scale / n
    return jnp.sum(partials) * jnp.float32(scale)


class KLLossPallas:
    """Mirror of mmseg KLLoss. No learnable parameters (loss module)."""

    def __init__(self, loss_weight: float = 0.1, reduction: str = 'mean'):
        self.loss_weight = loss_weight
        self.reduction = reduction

    def __call__(self, mu, std):
        return kl_loss_forward(mu, std, self.loss_weight, self.reduction)


def _reference(mu, std, loss_weight=0.1, reduction='mean'):
    """Pure-JAX faithful re-implementation of the PyTorch module."""
    losses = []
    for i in range(mu.shape[0]):
        term = (mu[i].astype(jnp.float32) ** 2
                + std[i].astype(jnp.float32) ** 2
                - 2.0 * jnp.log(std[i].astype(jnp.float32)) - 1.0)
        red = jnp.mean(term) if reduction == 'mean' else jnp.sum(term)
        losses.append(0.5 * red * loss_weight)
    return loss_weight * sum(losses) / mu.shape[0]


if __name__ == "__main__":
    key = jax.random.PRNGKey(0)

    # Main test: module-typical NCHW shapes.
    k_mu, k_std, k2_mu, k2_std, k3_mu, k3_std = jax.random.split(key, 6)
    B, C, H, W = 2, 4, 16, 16
    mu = jax.random.normal(k_mu, (B, C, H, W), dtype=jnp.float32)
    std = jax.random.uniform(k_std, (B, C, H, W), dtype=jnp.float32,
                             minval=0.5, maxval=1.5)

    loss_mod = KLLossPallas(loss_weight=0.1, reduction='mean')
    out = jax.block_until_ready(loss_mod(mu, std))
    ref = _reference(mu, std, loss_weight=0.1, reduction='mean')
    np.testing.assert_allclose(np.asarray(out), np.asarray(ref),
                               rtol=1e-5, atol=1e-6)

    # Extra check: non-lane-aligned element count (exercises tail padding).
    mu_b = jax.random.normal(k2_mu, (2, 3, 5, 7), dtype=jnp.float32)
    std_b = jax.random.uniform(k2_std, (2, 3, 5, 7), dtype=jnp.float32,
                               minval=0.5, maxval=1.5)
    out_b = jax.block_until_ready(
        kl_loss_forward(mu_b, std_b, loss_weight=0.1, reduction='sum'))
    ref_b = _reference(mu_b, std_b, loss_weight=0.1, reduction='sum')
    np.testing.assert_allclose(np.asarray(out_b), np.asarray(ref_b),
                               rtol=1e-5, atol=1e-6)

    # Extra check: multiple grid chunks with a ragged last block, bf16 inputs
    # kept in native dtype in HBM (upcast happens inside the kernel).
    mu_c = jax.random.normal(k3_mu, (2, 8, 80, 80), dtype=jnp.bfloat16)
    std_c = jax.random.uniform(k3_std, (2, 8, 80, 80), dtype=jnp.bfloat16,
                               minval=0.5, maxval=1.5)
    out_c = jax.block_until_ready(
        kl_loss_forward(mu_c, std_c, loss_weight=0.1, reduction='mean'))
    ref_c = _reference(mu_c, std_c, loss_weight=0.1, reduction='mean')
    np.testing.assert_allclose(np.asarray(out_c), np.asarray(ref_c),
                               rtol=2e-2, atol=1e-4)

    print("KERNEL_OK")
</pallas_src>

<mosaic_0001>
module attributes {stable_mosaic.version = 11 : i64} {
  func.func @_kl_partial_kernel(%arg0: i32, %arg1: memref<16x128xf32, #tpu.memory_space<vmem>>, %arg2: memref<16x128xf32, #tpu.memory_space<vmem>>, %arg3: memref<1x8x128xf32, #tpu.memory_space<vmem>>) attributes {dimension_semantics = [#tpu.dimension_semantics<parallel>], iteration_bounds = array<i64: 1>, scalar_prefetch = 0 : i64, scratch_operands = 0 : i64, tpu.core_type = #tpu.core_type<tc>, window_params = [{transform_indices = @transform_0, window_bounds = array<i64: 16, 128>}, {transform_indices = @transform_1, window_bounds = array<i64: 16, 128>}, {transform_indices = @transform_2, window_bounds = array<i64: 1, 8, 128>}]} {
    %c0 = arith.constant 0 : index
    %c0_0 = arith.constant 0 : index
    %0 = vector.load %arg1[%c0, %c0_0] : memref<16x128xf32, #tpu.memory_space<vmem>>, vector<16x128xf32>
    %c0_1 = arith.constant 0 : index
    %c0_2 = arith.constant 0 : index
    %1 = vector.load %arg2[%c0_1, %c0_2] : memref<16x128xf32, #tpu.memory_space<vmem>>, vector<16x128xf32>
    %2 = arith.mulf %0, %0 : vector<16x128xf32>
    %3 = arith.mulf %1, %1 : vector<16x128xf32>
    %4 = arith.addf %2, %3 : vector<16x128xf32>
    %5 = math.log %1 : vector<16x128xf32>
    %cst = arith.constant 2.000000e+00 : f32
    %6 = vector.broadcast %cst : f32 to vector<16x128xf32>
    %7 = arith.mulf %6, %5 : vector<16x128xf32>
    %8 = arith.subf %4, %7 : vector<16x128xf32>
    %cst_3 = arith.constant 1.000000e+00 : f32
    %9 = vector.broadcast %cst_3 : f32 to vector<16x128xf32>
    %10 = arith.subf %8, %9 : vector<16x128xf32>
    %11 = vector.shape_cast %10 : vector<16x128xf32> to vector<2x8x128xf32>
    %cst_4 = arith.constant dense<0.000000e+00> : vector<8x128xf32>
    %12 = vector.multi_reduction <add>, %11, %cst_4 [0] : vector<2x8x128xf32> to vector<8x128xf32>
    %c0_5 = arith.constant 0 : index
    %c0_6 = arith.constant 0 : index
    %c0_7 = arith.constant 0 : index
    %13 = vector.load %arg3[%c0_5, %c0_6, %c0_7] : memref<1x8x128xf32, #tpu.memory_space<vmem>>, vector<1x8x128xf32>
    %14 = vector.shape_cast %13 : vector<1x8x128xf32> to vector<8x128xf32>
    %15 = vector.shape_cast %12 : vector<8x128xf32> to vector<1x8x128xf32>
    tpu.vector_store %arg3[%c0_5, %c0_6, %c0_7], %15 {strides = array<i32>} : memref<1x8x128xf32, #tpu.memory_space<vmem>>, vector<1x8x128xf32>,
    return
  }
  func.func @transform_0(%arg0: i32) -> (i32, i32) {
    %c0_i32 = arith.constant 0 : i32
    %c0_i32_0 = arith.constant 0 : i32
    return %arg0, %c0_i32 : i32, i32
  }
  func.func @transform_1(%arg0: i32) -> (i32, i32) {
    %c0_i32 = arith.constant 0 : i32
    %c0_i32_0 = arith.constant 0 : i32
    return %arg0, %c0_i32 : i32, i32
  }
  func.func @transform_2(%arg0: i32) -> (i32, i32, i32) {
    %c0_i32 = arith.constant 0 : i32
    %c0_i32_0 = arith.constant 0 : i32
    %c0_i32_1 = arith.constant 0 : i32
    return %arg0, %c0_i32, %c0_i32_0 : i32, i32, i32
  }
}

</mosaic_0001>

<llo_original>
// kernel: tpu_custom_call.1
$region0: #{tpu_custom_call.1}
  #allocation0 [shape = 'u32[]', space=smem, size = 0x4, offset = 0x4, fixed_abs, tag = 'smem constant byte address 0x4 - core index']
  #allocation1 [shape = 'u32[144,128]{1,0:T(1,128)}', space=vmem, size = 0x12000, scoped, tag = 'internal scratch']
  %s0 = inlined_call_operand.hbm [shape: f32[16,128], index: 0, kind: input, shape index: {}]
  %s1 = inlined_call_operand.hbm [shape: f32[16,128], index: 1, kind: input, shape index: {}]
  %s2 = inlined_call_operand.hbm [shape: f32[1,8,128], index: 2, kind: output, shape index: {}]
  %s3 = sld [smem:[#allocation0]]
  $region26: #{tpu_custom_call.1} parent=0
    _
  %s5 = ssub.s32 1, %s3
  %s6 = scalar_select 0, %s5, %s3
  $region1: #{tpu_custom_call.1} parent=0
    #allocation2 [shape = 'u8[8192]{0}', space=vmem, size = 0x2000, scoped, tag = 'input window, operand 0, single buffered']
    #allocation3 [shape = 's32[1]{0}', space=sflag, size = 0x4, scoped, tag = 'scoped memory for tpu_custom_call.1']
    #allocation4 [shape = 's32[1]{0}', space=sflag, size = 0x4, scoped, tag = 'scoped memory for tpu_custom_call.1']
    #allocation5 [shape = 'u8[8192]{0}', space=vmem, size = 0x2000, scoped, tag = 'input window, operand 1, single buffered']
    #allocation6 [shape = 's32[1]{0}', space=sflag, size = 0x4, scoped, tag = 'scoped memory for tpu_custom_call.1']
    #allocation7 [shape = 'u8[4096]{0}', space=vmem, size = 0x1000, scoped, tag = 'output window, operand 0, single buffered']
    %7 = vsyncpa [#allocation3], 0
    %8 = vsyncpa [#allocation6], 0
    %9 = vsyncpa [#allocation4], 0
    // Predicated region
    $region2: #{tpu_custom_call.1} parent=1 // pred_check
      _
    $region3: #{tpu_custom_call.1} parent=1 // pred_check_branch
      %11 = sbr.rel (0) target = $region5
    $region4: #{tpu_custom_call.1} parent=1 // pred_region
      %s13 = ssub.s32 256, 256
      %14 = vsyncadd [#allocation3], %s13
      %s15 = sshll.u32 [#allocation2], 4
      %s16 = int_to_ptr.vmem [resolvable:$true] %s15
      %21 = dma.hbm_to_vmem [thread:$0]  %s0, 256, %s16, [#allocation3], 128, 128, 8
    $region5: #{tpu_custom_call.1} parent=1 // pred_fallthru
      _
    // Predicated region
    $region6: #{tpu_custom_call.1} parent=1 // pred_check
      _
    $region7: #{tpu_custom_call.1} parent=1 // pred_check_branch
      %23 = sbr.rel (0) target = $region9
    $region8: #{tpu_custom_call.1} parent=1 // pred_region
      %s25 = ssub.s32 256, 256
      %26 = vsyncadd [#allocation6], %s25
      %s27 = sshll.u32 [#allocation5], 4
      %s28 = int_to_ptr.vmem [resolvable:$true] %s27
      %33 = dma.hbm_to_vmem [thread:$0]  %s1, 256, %s28, [#allocation6], 128, 128, 8
    $region9: #{tpu_custom_call.1} parent=1 // pred_fallthru
      _
    // Predicated region
    $region10: #{tpu_custom_call.1} parent=1 // pred_check
      _
    $region11: #{tpu_custom_call.1} parent=1 // pred_check_branch
      %35 = sbr.rel (0) target = $region13
    $region12: #{tpu_custom_call.1} parent=1 // pred_region
      %36 = dma.done [#allocation3], 256
    $region13: #{tpu_custom_call.1} parent=1 // pred_fallthru
      _
    // Predicated region
    $region14: #{tpu_custom_call.1} parent=1 // pred_check
      _
    $region15: #{tpu_custom_call.1} parent=1 // pred_check_branch
      %38 = sbr.rel (0) target = $region17
    $region16: #{tpu_custom_call.1} parent=1 // pred_region
      %39 = dma.done [#allocation6], 256
    $region17: #{tpu_custom_call.1} parent=1 // pred_fallthru
      _
    %v40 = vld [vmem:[#allocation2] sm:$0xff]
    %v41 = vld [vmem:[#allocation2 + $0x8] sm:$0xff]
    %v42 = vld [vmem:[#allocation5] sm:$0xff]
    %v43 = vld [vmem:[#allocation5 + $0x8] sm:$0xff]
    %v44 = vmul.f32 %v40, %v40
    %v45 = vmul.f32 %v41, %v41
    %v46 = vmul.f32 %v42, %v42
    %v47 = vmul.f32 %v43, %v43
    %v48 = vadd.f32 %v44, %v46
    %v49 = vadd.f32 %v45, %v47
    %v50 = vlog2.pop %v42
    %v51 = vmul.f32 %v50, 0.6931472
    %v52 = vlog2.pop %v43
    %v53 = vmul.f32 %v52, 0.6931472
    %v54 = vmul.f32 %v51, 2.0
    %v55 = vmul.f32 %v53, 2.0
    %v56 = vsub.f32 %v48, %v54
    %v57 = vsub.f32 %v49, %v55
    %v58 = vsub.f32 %v56, 1.0
    %v59 = vsub.f32 %v57, 1.0
    %v60 = vadd.f32 %v58, %v59
    %61 = vst [vmem:[#allocation7] sm:$0xff] %v60
    // Predicated region
    $region18: #{tpu_custom_call.1} parent=1 // pred_check
      _
    $region19: #{tpu_custom_call.1} parent=1 // pred_check_branch
      %63 = sbr.rel (0) target = $region21
    $region20: #{tpu_custom_call.1} parent=1 // pred_region
      %s65 = ssub.s32 128, 128
      %66 = vsyncadd [#allocation4], %s65
      %s68 = sshll.u32 [#allocation7], 4
      %s69 = int_to_ptr.vmem [resolvable:$true] %s68
      %71 = dma.vmem_to_hbm [thread:$0]  %s69, 128, %s2, [#allocation4]
    $region21: #{tpu_custom_call.1} parent=1 // pred_fallthru
      _
    // Predicated region
    $region22: #{tpu_custom_call.1} parent=1 // pred_check
      _
    $region23: #{tpu_custom_call.1} parent=1 // pred_check_branch
      %73 = sbr.rel (0) target = $region25
    $region24: #{tpu_custom_call.1} parent=1 // pred_region
      %74 = dma.done [#allocation4], 128
    $region25: #{tpu_custom_call.1} parent=1 // pred_fallthru
      _
    %75 = vsyncpa [#allocation3], 1
    %76 = vsyncpa [#allocation6], 1
    %77 = vsyncpa [#allocation4], 1

</llo_original>
